<compile_context>
chip_gen: v7x
topology: tpu7x:2x2x1
jax: 0.10.0
libtpu: 0.0.40
codegen_flags: <defaults>
</compile_context>

<pallas_src>
import functools

import jax
import jax.numpy as jnp
from jax.experimental import pallas as pl
from jax.experimental.pallas import tpu as pltpu


def _make_dqn_kernel(use_bf16: bool):
    mm_dtype = jnp.bfloat16 if use_bf16 else jnp.float32

    def kernel(x_ref, w1_ref, b1_ref, w2_ref, b2_ref,
               w3_ref, b3_ref, w4_ref, b4_ref, o_ref):
        # `x = x.to(torch.float32)` happens here, after the VMEM load.
        h = x_ref[...].astype(jnp.float32)

        def linear(h, w_ref, b_ref):
            # MXU matmul: bf16 x bf16 -> f32 accumulate on the peak path;
            # bias add stays in f32 on the VPU.
            y = jnp.dot(h.astype(mm_dtype), w_ref[...],
                        preferred_element_type=jnp.float32)
            return y + b_ref[...]

        h = jnp.maximum(linear(h, w1_ref, b1_ref), 0.0)   # layer1 + layer2
        h = jnp.maximum(linear(h, w2_ref, b2_ref), 0.0)   # layer3 + layer4
        h = jnp.maximum(linear(h, w3_ref, b3_ref), 0.0)   # layer5 + layer6
        q = linear(h, w4_ref, b4_ref)                      # layer7 (lane-dense)
        o_ref[...] = q.astype(o_ref.dtype)                 # unmasked vst

    return kernel


@functools.partial(jax.jit, static_argnames=("block_b", "use_bf16"))
def dqn_forward(x, params, *, block_b=256, use_bf16=True):
    """Fused DQN forward. x: (B, in_dim), any dtype -> (B, n_actions) f32."""
    (w1, b1), (w2, b2), (w3, b3), (w4, b4) = params
    B, in_dim = x.shape
    n_actions = w4.shape[1]

    wt_dtype = jnp.bfloat16 if use_bf16 else jnp.float32
    w1, w2, w3, w4 = (w.astype(wt_dtype) for w in (w1, w2, w3, w4))
    b1, b2, b3, b4 = (b.astype(jnp.float32) for b in (b1, b2, b3, b4))

    # Lane-dense output: zero-pad the final Linear to a multiple of 128 out
    # features so the kernel's output store is an unmasked, full-lane vst.
    n_pad = max(128, ((n_actions + 127) // 128) * 128)
    if n_pad != n_actions:
        w4 = jnp.pad(w4, ((0, 0), (0, n_pad - n_actions)))
        b4 = jnp.pad(b4, ((0, 0), (0, n_pad - n_actions)))

    # Batch tile: multiple of 8 sublanes, or the full batch if B is small.
    bb = min(block_b, B)
    if bb < B:
        bb = max(8, (bb // 8) * 8)
    grid = (pl.cdiv(B, bb),)

    x_spec = pl.BlockSpec((bb, in_dim), lambda i: (i, 0))
    out_spec = pl.BlockSpec((bb, n_pad), lambda i: (i, 0))
    # Grid-invariant blocks: DMA'd once, VMEM-resident across all grid steps.
    resident = lambda arr: pl.BlockSpec(arr.shape, lambda i: (0, 0))

    q_padded = pl.pallas_call(
        _make_dqn_kernel(use_bf16),
        out_shape=jax.ShapeDtypeStruct((B, n_pad), jnp.float32),
        grid=grid,
        in_specs=[x_spec,
                  resident(w1), resident(b1),
                  resident(w2), resident(b2),
                  resident(w3), resident(b3),
                  resident(w4), resident(b4)],
        out_specs=out_spec,
        compiler_params=pltpu.CompilerParams(
            dimension_semantics=("parallel",)),   # shard batch over 2 TCs (v7x)
    )(x, w1, b1, w2, b2, w3, b3, w4, b4)

    # Layout plumbing only: slice the lane-dense slab back to n_actions.
    return q_padded[:, :n_actions]


def init_params(key, in_dim, hidden, n_actions):
    """Deterministic synthetic parameters (torch-Linear-like uniform init)."""
    dims = [(in_dim, hidden), (hidden, hidden), (hidden, hidden),
            (hidden, n_actions)]
    params = []
    for i, (fan_in, fan_out) in enumerate(dims):
        kw, kb = jax.random.split(jax.random.fold_in(key, i))
        bound = 1.0 / jnp.sqrt(jnp.float32(fan_in))
        w = jax.random.uniform(kw, (fan_in, fan_out), jnp.float32, -bound, bound)
        b = jax.random.uniform(kb, (1, fan_out), jnp.float32, -bound, bound)
        params.append((w, b))
    return params


def dqn_reference(x, params, *, use_bf16=False):
    """Pure-JAX reference. use_bf16=True mirrors the kernel's MXU dtype."""
    mm_dtype = jnp.bfloat16 if use_bf16 else jnp.float32
    h = x.astype(jnp.float32)
    for i, (w, b) in enumerate(params):
        h = jnp.dot(h.astype(mm_dtype), w.astype(mm_dtype),
                    preferred_element_type=jnp.float32) + b.astype(jnp.float32)
        if i < len(params) - 1:
            h = jnp.maximum(h, 0.0)
    return h


if __name__ == "__main__":
    key = jax.random.PRNGKey(0)
    k_x, k_p = jax.random.split(key)

    in_dim, hidden, n_actions = 16, 128, 8
    params = init_params(k_p, in_dim, hidden, n_actions)

    # --- 1) small (inference-sized) batch, exact-f32 path, single grid step ---
    x_small = jax.random.normal(k_x, (8, in_dim), jnp.float32)
    q32 = dqn_forward(x_small, params, use_bf16=False)
    jax.block_until_ready(q32)
    ref32 = dqn_reference(x_small, params)
    assert q32.shape == (8, n_actions)
    assert jnp.max(jnp.abs(q32 - ref32)) < 1e-4

    # --- 2) training-sized batch: batch grid + resident weights + bf16 MXU ---
    x_big = jax.random.normal(jax.random.fold_in(k_x, 1),
                              (512, in_dim), jnp.float32)
    q_bf = dqn_forward(x_big, params, block_b=128, use_bf16=True)
    jax.block_until_ready(q_bf)
    assert q_bf.shape == (512, n_actions)
    # tight check vs a reference that mirrors the kernel's bf16-in/f32-acc math
    ref_bf = dqn_reference(x_big, params, use_bf16=True)
    assert jnp.max(jnp.abs(q_bf - ref_bf)) < 1e-3
    # loose check vs the pure-f32 PyTorch-semantics reference
    ref_f32 = dqn_reference(x_big, params)
    assert jnp.max(jnp.abs(q_bf - ref_f32)) < 5e-2

    # --- 3) ragged batch (not a multiple of the block) still works ---
    x_rag = jax.random.normal(jax.random.fold_in(k_x, 2),
                              (200, in_dim), jnp.float32)
    q_rag = dqn_forward(x_rag, params, block_b=128, use_bf16=False)
    jax.block_until_ready(q_rag)
    assert q_rag.shape == (200, n_actions)
    assert jnp.max(jnp.abs(q_rag - dqn_reference(x_rag, params))) < 1e-4

    print("KERNEL_OK")
</pallas_src>

<mosaic_0001>
module attributes {stable_mosaic.version = 11 : i64} {
  func.func @kernel(%arg0: i32, %arg1: memref<8x16xf32, #tpu.memory_space<vmem>>, %arg2: memref<16x128xf32, #tpu.memory_space<vmem>>, %arg3: memref<1x128xf32, #tpu.memory_space<vmem>>, %arg4: memref<128x128xf32, #tpu.memory_space<vmem>>, %arg5: memref<1x128xf32, #tpu.memory_space<vmem>>, %arg6: memref<128x128xf32, #tpu.memory_space<vmem>>, %arg7: memref<1x128xf32, #tpu.memory_space<vmem>>, %arg8: memref<128x128xf32, #tpu.memory_space<vmem>>, %arg9: memref<1x128xf32, #tpu.memory_space<vmem>>, %arg10: memref<8x128xf32, #tpu.memory_space<vmem>>) attributes {dimension_semantics = [#tpu.dimension_semantics<parallel>], iteration_bounds = array<i64: 1>, scalar_prefetch = 0 : i64, scratch_operands = 0 : i64, tpu.core_type = #tpu.core_type<tc>, window_params = [{transform_indices = @transform_0, window_bounds = array<i64: 8, 16>}, {pipeline_mode = #tpu.pipeline_mode<synchronous>, transform_indices = @transform_1, window_bounds = array<i64: 16, 128>}, {pipeline_mode = #tpu.pipeline_mode<synchronous>, transform_indices = @transform_2, window_bounds = array<i64: 1, 128>}, {pipeline_mode = #tpu.pipeline_mode<synchronous>, transform_indices = @transform_3, window_bounds = array<i64: 128, 128>}, {pipeline_mode = #tpu.pipeline_mode<synchronous>, transform_indices = @transform_4, window_bounds = array<i64: 1, 128>}, {pipeline_mode = #tpu.pipeline_mode<synchronous>, transform_indices = @transform_5, window_bounds = array<i64: 128, 128>}, {pipeline_mode = #tpu.pipeline_mode<synchronous>, transform_indices = @transform_6, window_bounds = array<i64: 1, 128>}, {pipeline_mode = #tpu.pipeline_mode<synchronous>, transform_indices = @transform_7, window_bounds = array<i64: 128, 128>}, {pipeline_mode = #tpu.pipeline_mode<synchronous>, transform_indices = @transform_8, window_bounds = array<i64: 1, 128>}, {transform_indices = @transform_9, window_bounds = array<i64: 8, 128>}]} {
    %c0 = arith.constant 0 : index
    %c0_0 = arith.constant 0 : index
    %0 = vector.load %arg1[%c0, %c0_0] : memref<8x16xf32, #tpu.memory_space<vmem>>, vector<8x16xf32>
    %c0_1 = arith.constant 0 : index
    %c0_2 = arith.constant 0 : index
    %1 = vector.load %arg2[%c0_1, %c0_2] : memref<16x128xf32, #tpu.memory_space<vmem>>, vector<16x128xf32>
    %cst = arith.constant dense<0.000000e+00> : vector<8x128xf32>
    %2 = tpu.matmul %0, %1, %cst {dimension_numbers = #tpu.dot_dimension_numbers<[1], [0], [0], [1], [0, 0, 1, 1], [], []>} : vector<8x16xf32>, vector<16x128xf32>, vector<8x128xf32> -> vector<8x128xf32>
    %c0_3 = arith.constant 0 : index
    %c0_4 = arith.constant 0 : index
    %3 = vector.load %arg3[%c0_3, %c0_4] : memref<1x128xf32, #tpu.memory_space<vmem>>, vector<1x128xf32>
    %4 = vector.broadcast %3 : vector<1x128xf32> to vector<8x128xf32>
    %5 = arith.addf %2, %4 : vector<8x128xf32>
    %cst_5 = arith.constant 0.000000e+00 : f32
    %6 = vector.broadcast %cst_5 : f32 to vector<8x128xf32>
    %7 = arith.maximumf %5, %6 : vector<8x128xf32>
    %c0_6 = arith.constant 0 : index
    %c0_7 = arith.constant 0 : index
    %8 = vector.load %arg4[%c0_6, %c0_7] : memref<128x128xf32, #tpu.memory_space<vmem>>, vector<128x128xf32>
    %cst_8 = arith.constant dense<0.000000e+00> : vector<8x128xf32>
    %9 = tpu.matmul %7, %8, %cst_8 {dimension_numbers = #tpu.dot_dimension_numbers<[1], [0], [0], [1], [0, 0, 1, 1], [], []>} : vector<8x128xf32>, vector<128x128xf32>, vector<8x128xf32> -> vector<8x128xf32>
    %c0_9 = arith.constant 0 : index
    %c0_10 = arith.constant 0 : index
    %10 = vector.load %arg5[%c0_9, %c0_10] : memref<1x128xf32, #tpu.memory_space<vmem>>, vector<1x128xf32>
    %11 = vector.broadcast %10 : vector<1x128xf32> to vector<8x128xf32>
    %12 = arith.addf %9, %11 : vector<8x128xf32>
    %cst_11 = arith.constant 0.000000e+00 : f32
    %13 = vector.broadcast %cst_11 : f32 to vector<8x128xf32>
    %14 = arith.maximumf %12, %13 : vector<8x128xf32>
    %c0_12 = arith.constant 0 : index
    %c0_13 = arith.constant 0 : index
    %15 = vector.load %arg6[%c0_12, %c0_13] : memref<128x128xf32, #tpu.memory_space<vmem>>, vector<128x128xf32>
    %cst_14 = arith.constant dense<0.000000e+00> : vector<8x128xf32>
    %16 = tpu.matmul %14, %15, %cst_14 {dimension_numbers = #tpu.dot_dimension_numbers<[1], [0], [0], [1], [0, 0, 1, 1], [], []>} : vector<8x128xf32>, vector<128x128xf32>, vector<8x128xf32> -> vector<8x128xf32>
    %c0_15 = arith.constant 0 : index
    %c0_16 = arith.constant 0 : index
    %17 = vector.load %arg7[%c0_15, %c0_16] : memref<1x128xf32, #tpu.memory_space<vmem>>, vector<1x128xf32>
    %18 = vector.broadcast %17 : vector<1x128xf32> to vector<8x128xf32>
    %19 = arith.addf %16, %18 : vector<8x128xf32>
    %cst_17 = arith.constant 0.000000e+00 : f32
    %20 = vector.broadcast %cst_17 : f32 to vector<8x128xf32>
    %21 = arith.maximumf %19, %20 : vector<8x128xf32>
    %c0_18 = arith.constant 0 : index
    %c0_19 = arith.constant 0 : index
    %22 = vector.load %arg8[%c0_18, %c0_19] : memref<128x128xf32, #tpu.memory_space<vmem>>, vector<128x128xf32>
    %cst_20 = arith.constant dense<0.000000e+00> : vector<8x128xf32>
    %23 = tpu.matmul %21, %22, %cst_20 {dimension_numbers = #tpu.dot_dimension_numbers<[1], [0], [0], [1], [0, 0, 1, 1], [], []>} : vector<8x128xf32>, vector<128x128xf32>, vector<8x128xf32> -> vector<8x128xf32>
    %c0_21 = arith.constant 0 : index
    %c0_22 = arith.constant 0 : index
    %24 = vector.load %arg9[%c0_21, %c0_22] : memref<1x128xf32, #tpu.memory_space<vmem>>, vector<1x128xf32>
    %25 = vector.broadcast %24 : vector<1x128xf32> to vector<8x128xf32>
    %26 = arith.addf %23, %25 : vector<8x128xf32>
    %c0_23 = arith.constant 0 : index
    %c0_24 = arith.constant 0 : index
    %27 = vector.load %arg10[%c0_23, %c0_24] : memref<8x128xf32, #tpu.memory_space<vmem>>, vector<8x128xf32>
    tpu.vector_store %arg10[%c0_23, %c0_24], %26 {strides = array<i32>} : memref<8x128xf32, #tpu.memory_space<vmem>>, vector<8x128xf32>,
    return
  }
  func.func @transform_0(%arg0: i32) -> (i32, i32) {
    %c0_i32 = arith.constant 0 : i32
    %c0_i32_0 = arith.constant 0 : i32
    return %arg0, %c0_i32 : i32, i32
  }
  func.func @transform_1(%arg0: i32) -> (i32, i32) {
    %c0_i32 = arith.constant 0 : i32
    %c0_i32_0 = arith.constant 0 : i32
    %c0_i32_1 = arith.constant 0 : i32
    return %c0_i32, %c0_i32_0 : i32, i32
  }
  func.func @transform_2(%arg0: i32) -> (i32, i32) {
    %c0_i32 = arith.constant 0 : i32
    %c0_i32_0 = arith.constant 0 : i32
    %c0_i32_1 = arith.constant 0 : i32
    return %c0_i32, %c0_i32_0 : i32, i32
  }
  func.func @transform_3(%arg0: i32) -> (i32, i32) {
    %c0_i32 = arith.constant 0 : i32
    %c0_i32_0 = arith.constant 0 : i32
    %c0_i32_1 = arith.constant 0 : i32
    return %c0_i32, %c0_i32_0 : i32, i32
  }
  func.func @transform_4(%arg0: i32) -> (i32, i32) {
    %c0_i32 = arith.constant 0 : i32
    %c0_i32_0 = arith.constant 0 : i32
    %c0_i32_1 = arith.constant 0 : i32
    return %c0_i32, %c0_i32_0 : i32, i32
  }
  func.func @transform_5(%arg0: i32) -> (i32, i32) {
    %c0_i32 = arith.constant 0 : i32
    %c0_i32_0 = arith.constant 0 : i32
    %c0_i32_1 = arith.constant 0 : i32
    return %c0_i32, %c0_i32_0 : i32, i32
  }
  func.func @transform_6(%arg0: i32) -> (i32, i32) {
    %c0_i32 = arith.constant 0 : i32
    %c0_i32_0 = arith.constant 0 : i32
    %c0_i32_1 = arith.constant 0 : i32
    return %c0_i32, %c0_i32_0 : i32, i32
  }
  func.func @transform_7(%arg0: i32) -> (i32, i32) {
    %c0_i32 = arith.constant 0 : i32
    %c0_i32_0 = arith.constant 0 : i32
    %c0_i32_1 = arith.constant 0 : i32
    return %c0_i32, %c0_i32_0 : i32, i32
  }
  func.func @transform_8(%arg0: i32) -> (i32, i32) {
    %c0_i32 = arith.constant 0 : i32
    %c0_i32_0 = arith.constant 0 : i32
    %c0_i32_1 = arith.constant 0 : i32
    return %c0_i32, %c0_i32_0 : i32, i32
  }
  func.func @transform_9(%arg0: i32) -> (i32, i32) {
    %c0_i32 = arith.constant 0 : i32
    %c0_i32_0 = arith.constant 0 : i32
    return %arg0, %c0_i32 : i32, i32
  }
}

</mosaic_0001>

<llo_original>
// kernel: dqn_forward.1
$region0: #{dqn_forward.1}
  #allocation0 [shape = 'u32[]', space=smem, size = 0x4, offset = 0x4, fixed_abs, tag = 'smem constant byte address 0x4 - core index']
  #allocation1 [shape = 'u32[144,128]{1,0:T(1,128)}', space=vmem, size = 0x12000, scoped, tag = 'internal scratch']
  %s0 = inlined_call_operand.vmem [shape: f32[8,16], index: 0, kind: input, shape index: {}]
  %s1 = inlined_call_operand.vmem [shape: f32[16,128], index: 1, kind: input, shape index: {}]
  %s2 = inlined_call_operand.vmem [shape: f32[1,128], index: 2, kind: input, shape index: {}]
  %s3 = inlined_call_operand.vmem [shape: f32[128,128], index: 3, kind: input, shape index: {}]
  %s4 = inlined_call_operand.vmem [shape: f32[1,128], index: 4, kind: input, shape index: {}]
  %s5 = inlined_call_operand.vmem [shape: f32[128,128], index: 5, kind: input, shape index: {}]
  %s6 = inlined_call_operand.vmem [shape: f32[1,128], index: 6, kind: input, shape index: {}]
  %s7 = inlined_call_operand.vmem [shape: f32[128,128], index: 7, kind: input, shape index: {}]
  %s8 = inlined_call_operand.vmem [shape: f32[1,128], index: 8, kind: input, shape index: {}]
  %s9 = inlined_call_operand.hbm [shape: f32[8,128], index: 9, kind: output, shape index: {}]
  %s10 = sld [smem:[#allocation0]]
  $region46: #{dqn_forward.1} parent=0
    _
  %s12 = ssub.s32 1, %s10
  %s13 = scalar_select 0, %s12, %s10
  $region1: #{dqn_forward.1} parent=0
    #allocation2 [shape = 'u8[4096]{0}', space=vmem, size = 0x1000, scoped, tag = 'output window, operand 0, single buffered']
    #allocation3 [shape = 's32[1]{0}', space=sflag, size = 0x4, scoped, tag = 'scoped memory for dqn_forward.1']
    %14 = vsyncpa [#allocation3], 0
    // Predicated region
    $region2: #{dqn_forward.1} parent=1 // pred_check
      _
    $region3: #{dqn_forward.1} parent=1 // pred_check_branch
      %16 = sbr.rel (0) target = $region5
    $region4: #{dqn_forward.1} parent=1 // pred_region
      _
    $region5: #{dqn_forward.1} parent=1 // pred_fallthru
      _
    // Predicated region
    $region6: #{dqn_forward.1} parent=1 // pred_check
      _
    $region7: #{dqn_forward.1} parent=1 // pred_check_branch
      %18 = sbr.rel (0) target = $region9
    $region8: #{dqn_forward.1} parent=1 // pred_region
      _
    $region9: #{dqn_forward.1} parent=1 // pred_fallthru
      _
    // Predicated region
    $region10: #{dqn_forward.1} parent=1 // pred_check
      _
    $region11: #{dqn_forward.1} parent=1 // pred_check_branch
      %20 = sbr.rel (0) target = $region13
    $region12: #{dqn_forward.1} parent=1 // pred_region
      _
    $region13: #{dqn_forward.1} parent=1 // pred_fallthru
      _
    // Predicated region
    $region14: #{dqn_forward.1} parent=1 // pred_check
      _
    $region15: #{dqn_forward.1} parent=1 // pred_check_branch
      %22 = sbr.rel (0) target = $region17
    $region16: #{dqn_forward.1} parent=1 // pred_region
      _
    $region17: #{dqn_forward.1} parent=1 // pred_fallthru
      _
    // Predicated region
    $region18: #{dqn_forward.1} parent=1 // pred_check
      _
    $region19: #{dqn_forward.1} parent=1 // pred_check_branch
      %24 = sbr.rel (0) target = $region21
    $region20: #{dqn_forward.1} parent=1 // pred_region
      _
    $region21: #{dqn_forward.1} parent=1 // pred_fallthru
      _
    // Predicated region
    $region22: #{dqn_forward.1} parent=1 // pred_check
      _
    $region23: #{dqn_forward.1} parent=1 // pred_check_branch
      %26 = sbr.rel (0) target = $region25
    $region24: #{dqn_forward.1} parent=1 // pred_region
      _
    $region25: #{dqn_forward.1} parent=1 // pred_fallthru
      _
    // Predicated region
    $region26: #{dqn_forward.1} parent=1 // pred_check
      _
    $region27: #{dqn_forward.1} parent=1 // pred_check_branch
      %28 = sbr.rel (0) target = $region29
    $region28: #{dqn_forward.1} parent=1 // pred_region
      _
    $region29: #{dqn_forward.1} parent=1 // pred_fallthru
      _
    // Predicated region
    $region30: #{dqn_forward.1} parent=1 // pred_check
      _
    $region31: #{dqn_forward.1} parent=1 // pred_check_branch
      %30 = sbr.rel (0) target = $region33
    $region32: #{dqn_forward.1} parent=1 // pred_region
      _
    $region33: #{dqn_forward.1} parent=1 // pred_fallthru
      _
    // Predicated region
    $region34: #{dqn_forward.1} parent=1 // pred_check
      _
    $region35: #{dqn_forward.1} parent=1 // pred_check_branch
      %32 = sbr.rel (0) target = $region37
    $region36: #{dqn_forward.1} parent=1 // pred_region
      _
    $region37: #{dqn_forward.1} parent=1 // pred_fallthru
      _
    %v33 = vld [vmem:[%s0] sm:$0xff]
    %v34 = vld [vmem:[%s1] sm:$0xff]
    %v35 = vld [vmem:[%s1 + $0x8] sm:$0xff]
    %v36 = vld [vmem:[%s2] sm:$0x1]
    %v38 = vlaneseq
    %v39 = vshrl.u32 %v38, 7
    %v40 = vsub.s32 0, %v39
    %v41 = vrot.slane %v36, %v40
    %vm43 = vcmask 130048
    %v45 = vsel %vm43, %v33, 0
    %47 = vmatprep.subr.mxu0 0.0
    %48 = vmatpush1.msra.mxu0 %v34
    %49 = vmatprep.subr.mxu0 0.0
    %50 = vmatpush1.msra.mxu0 %v35
    %51 = vmatprep.subr.mxu0 0.0
    %52 = vmatpush1.msra.mxu0 0.0
    %53 = vmatprep.subr.mxu0 0.0
    %54 = vmatpush1.msra.mxu0 0.0
    %55 = vmatprep.subr.mxu0 0.0
    %56 = vmatpush1.msra.mxu0 0.0
    %57 = vmatprep.subr.mxu0 0.0
    %58 = vmatpush1.msra.mxu0 0.0
    %59 = vmatprep.subr.mxu0 0.0
    %60 = vmatpush1.msra.mxu0 0.0
    %61 = vmatprep.subr.mxu0 0.0
    %62 = vmatpush1.msra.mxu0 0.0
    %63 = vmatprep.subr.mxu0 0.0
    %64 = vmatpush1.msra.mxu0 0.0
    %65 = vmatprep.subr.mxu0 0.0
    %66 = vmatpush1.msra.mxu0 0.0
    %67 = vmatprep.subr.mxu0 0.0
    %68 = vmatpush1.msra.mxu0 0.0
    %69 = vmatprep.subr.mxu0 0.0
    %70 = vmatpush1.msra.mxu0 0.0
    %71 = vmatprep.subr.mxu0 0.0
    %72 = vmatpush1.msra.mxu0 0.0
    %73 = vmatprep.subr.mxu0 0.0
    %74 = vmatpush1.msra.mxu0 0.0
    %75 = vmatprep.subr.mxu0 0.0
    %76 = vmatpush1.msra.mxu0 0.0
    %77 = vmatprep.subr.mxu0 0.0
    %78 = vmatpush1.msra.mxu0 0.0
    %79 = vmatprep.subr.mxu0 0.0
    %80 = vmatpush1.msra.mxu0 0.0
    %81 = vmatprep.subr.mxu0 0.0
    %82 = vmatpush1.msra.mxu0 0.0
    %83 = vmatprep.subr.mxu0 0.0
    %84 = vmatpush1.msra.mxu0 0.0
    %85 = vmatprep.subr.mxu0 0.0
    %86 = vmatpush1.msra.mxu0 0.0
    %87 = vmatprep.subr.mxu0 0.0
    %88 = vmatpush1.msra.mxu0 0.0
    %89 = vmatprep.subr.mxu0 0.0
    %90 = vmatpush1.msra.mxu0 0.0
    %91 = vmatprep.subr.mxu0 0.0
    %92 = vmatpush1.msra.mxu0 0.0
    %93 = vmatprep.subr.mxu0 0.0
    %94 = vmatpush1.msra.mxu0 0.0
    %95 = vmatprep.subr.mxu0 0.0
    %96 = vmatpush1.msra.mxu0 0.0
    %97 = vmatprep.subr.mxu0 0.0
    %98 = vmatpush1.msra.mxu0 0.0
    %99 = vmatprep.subr.mxu0 0.0
    %100 = vmatpush1.msra.mxu0 0.0
    %101 = vmatprep.subr.mxu0 0.0
    %102 = vmatpush1.msra.mxu0 0.0
    %103 = vmatprep.subr.mxu0 0.0
    %104 = vmatpush1.msra.mxu0 0.0
    %105 = vmatprep.subr.mxu0 0.0
    %106 = vmatpush1.msra.mxu0 0.0
    %107 = vmatprep.subr.mxu0 0.0
    %108 = vmatpush1.msra.mxu0 0.0
    %109 = vmatprep.subr.mxu0 0.0
    %110 = vmatpush1.msra.mxu0 0.0
    %111 = vmatprep.mubr.f32.mxu0 0.0
    %112 = vmatmul.mubr.f32.gmra.mrb[0].mxu0 %v45
    %v113 = vpop.f32.mrb[0].mxu0
    %v114 = vadd.f32 %v41, %v113
    %v115 = vpop.f32.mrb[0].mxu0
    %116 = vdwg.mxu0
    %v117 = vmax.f32 %v114, 0.0
    %v118 = vld [vmem:[%s3] sm:$0xff]
    %v119 = vld [vmem:[%s3 + $0x8] sm:$0xff]
    %v120 = vld [vmem:[%s3 + $0x10] sm:$0xff]
    %v121 = vld [vmem:[%s3 + $0x18] sm:$0xff]
    %v122 = vld [vmem:[%s3 + $0x20] sm:$0xff]
    %v123 = vld [vmem:[%s3 + $0x28] sm:$0xff]
    %v124 = vld [vmem:[%s3 + $0x30] sm:$0xff]
    %v125 = vld [vmem:[%s3 + $0x38] sm:$0xff]
    %v126 = vld [vmem:[%s3 + $0x40] sm:$0xff]
    %v127 = vld [vmem:[%s3 + $0x48] sm:$0xff]
    %v128 = vld [vmem:[%s3 + $0x50] sm:$0xff]
    %v129 = vld [vmem:[%s3 + $0x58] sm:$0xff]
    %v130 = vld [vmem:[%s3 + $0x60] sm:$0xff]
    %v131 = vld [vmem:[%s3 + $0x68] sm:$0xff]
    %v132 = vld [vmem:[%s3 + $0x70] sm:$0xff]
    %v133 = vld [vmem:[%s3 + $0x78] sm:$0xff]
    %v134 = vld [vmem:[%s4] sm:$0x1]
    %v136 = vlaneseq
    %v137 = vshrl.u32 %v136, 7
    %v138 = vsub.s32 0, %v137
    %v139 = vrot.slane %v134, %v138
    %141 = vmatprep.subr.mxu0 0.0
    %142 = vmatpush1.msra.mxu0 %v118
    %143 = vmatprep.subr.mxu0 0.0
    %144 = vmatpush1.msra.mxu0 %v119
    %145 = vmatprep.subr.mxu0 0.0
    %146 = vmatpush1.msra.mxu0 %v120
    %147 = vmatprep.subr.mxu0 0.0
    %148 = vmatpush1.msra.mxu0 %v121
    %149 = vmatprep.subr.mxu0 0.0
    %150 = vmatpush1.msra.mxu0 %v122
    %151 = vmatprep.subr.mxu0 0.0
    %152 = vmatpush1.msra.mxu0 %v123
    %153 = vmatprep.subr.mxu0 0.0
    %154 = vmatpush1.msra.mxu0 %v124
    %155 = vmatprep.subr.mxu0 0.0
    %156 = vmatpush1.msra.mxu0 %v125
    %157 = vmatprep.subr.mxu0 0.0
    %158 = vmatpush1.msra.mxu0 %v126
    %159 = vmatprep.subr.mxu0 0.0
    %160 = vmatpush1.msra.mxu0 %v127
    %161 = vmatprep.subr.mxu0 0.0
    %162 = vmatpush1.msra.mxu0 %v128
    %163 = vmatprep.subr.mxu0 0.0
    %164 = vmatpush1.msra.mxu0 %v129
    %165 = vmatprep.subr.mxu0 0.0
    %166 = vmatpush1.msra.mxu0 %v130
    %167 = vmatprep.subr.mxu0 0.0
    %168 = vmatpush1.msra.mxu0 %v131
    %169 = vmatprep.subr.mxu0 0.0
    %170 = vmatpush1.msra.mxu0 %v132
    %171 = vmatprep.subr.mxu0 0.0
    %172 = vmatpush1.msra.mxu0 %v133
    %173 = vmatprep.subr.mxu0 0.0
    %174 = vmatpush1.msra.mxu0 0.0
    %175 = vmatprep.subr.mxu0 0.0
    %176 = vmatpush1.msra.mxu0 0.0
    %177 = vmatprep.subr.mxu0 0.0
    %178 = vmatpush1.msra.mxu0 0.0
    %179 = vmatprep.subr.mxu0 0.0
    %180 = vmatpush1.msra.mxu0 0.0
    %181 = vmatprep.subr.mxu0 0.0
    %182 = vmatpush1.msra.mxu0 0.0
    %183 = vmatprep.subr.mxu0 0.0
    %184 = vmatpush1.msra.mxu0 0.0
    %185 = vmatprep.subr.mxu0 0.0
    %186 = vmatpush1.msra.mxu0 0.0
    %187 = vmatprep.subr.mxu0 0.0
    %188 = vmatpush1.msra.mxu0 0.0
    %189 = vmatprep.subr.mxu0 0.0
    %190 = vmatpush1.msra.mxu0 0.0
    %191 = vmatprep.subr.mxu0 0.0
    %192 = vmatpush1.msra.mxu0 0.0
    %193 = vmatprep.subr.mxu0 0.0
    %194 = vmatpush1.msra.mxu0 0.0
    %195 = vmatprep.subr.mxu0 0.0
    %196 = vmatpush1.msra.mxu0 0.0
    %197 = vmatprep.subr.mxu0 0.0
    %198 = vmatpush1.msra.mxu0 0.0
    %199 = vmatprep.subr.mxu0 0.0
    %200 = vmatpush1.msra.mxu0 0.0
    %201 = vmatprep.subr.mxu0 0.0
    %202 = vmatpush1.msra.mxu0 0.0
    %203 = vmatprep.subr.mxu0 0.0
    %204 = vmatpush1.msra.mxu0 0.0
    %205 = vmatprep.mubr.f32.mxu0 0.0
    %206 = vmatmul.mubr.f32.gmra.mrb[0].mxu0 %v117
    %v207 = vpop.f32.mrb[0].mxu0
    %v208 = vadd.f32 %v139, %v207
    %v209 = vpop.f32.mrb[0].mxu0
    %210 = vdwg.mxu0
    %v211 = vmax.f32 %v208, 0.0
    %v212 = vld [vmem:[%s5] sm:$0xff]
    %v213 = vld [vmem:[%s5 + $0x8] sm:$0xff]
    %v214 = vld [vmem:[%s5 + $0x10] sm:$0xff]
    %v215 = vld [vmem:[%s5 + $0x18] sm:$0xff]
    %v216 = vld [vmem:[%s5 + $0x20] sm:$0xff]
    %v217 = vld [vmem:[%s5 + $0x28] sm:$0xff]
    %v218 = vld [vmem:[%s5 + $0x30] sm:$0xff]
    %v219 = vld [vmem:[%s5 + $0x38] sm:$0xff]
    %v220 = vld [vmem:[%s5 + $0x40] sm:$0xff]
    %v221 = vld [vmem:[%s5 + $0x48] sm:$0xff]
    %v222 = vld [vmem:[%s5 + $0x50] sm:$0xff]
    %v223 = vld [vmem:[%s5 + $0x58] sm:$0xff]
    %v224 = vld [vmem:[%s5 + $0x60] sm:$0xff]
    %v225 = vld [vmem:[%s5 + $0x68] sm:$0xff]
    %v226 = vld [vmem:[%s5 + $0x70] sm:$0xff]
    %v227 = vld [vmem:[%s5 + $0x78] sm:$0xff]
    %v228 = vld [vmem:[%s6] sm:$0x1]
    %v230 = vlaneseq
    %v231 = vshrl.u32 %v230, 7
    %v232 = vsub.s32 0, %v231
    %v233 = vrot.slane %v228, %v232
    %235 = vmatprep.subr.mxu0 0.0
    %236 = vmatpush1.msra.mxu0 %v212
    %237 = vmatprep.subr.mxu0 0.0
    %238 = vmatpush1.msra.mxu0 %v213
    %239 = vmatprep.subr.mxu0 0.0
    %240 = vmatpush1.msra.mxu0 %v214
    %241 = vmatprep.subr.mxu0 0.0
    %242 = vmatpush1.msra.mxu0 %v215
    %243 = vmatprep.subr.mxu0 0.0
    %244 = vmatpush1.msra.mxu0 %v216
    %245 = vmatprep.subr.mxu0 0.0
    %246 = vmatpush1.msra.mxu0 %v217
    %247 = vmatprep.subr.mxu0 0.0
    %248 = vmatpush1.msra.mxu0 %v218
    %249 = vmatprep.subr.mxu0 0.0
    %250 = vmatpush1.msra.mxu0 %v219
    %251 = vmatprep.subr.mxu0 0.0
    %252 = vmatpush1.msra.mxu0 %v220
    %253 = vmatprep.subr.mxu0 0.0
    %254 = vmatpush1.msra.mxu0 %v221
    %255 = vmatprep.subr.mxu0 0.0
    %256 = vmatpush1.msra.mxu0 %v222
    %257 = vmatprep.subr.mxu0 0.0
    %258 = vmatpush1.msra.mxu0 %v223
    %259 = vmatprep.subr.mxu0 0.0
    %260 = vmatpush1.msra.mxu0 %v224
    %261 = vmatprep.subr.mxu0 0.0
    %262 = vmatpush1.msra.mxu0 %v225
    %263 = vmatprep.subr.mxu0 0.0
    %264 = vmatpush1.msra.mxu0 %v226
    %265 = vmatprep.subr.mxu0 0.0
    %266 = vmatpush1.msra.mxu0 %v227
    %267 = vmatprep.subr.mxu0 0.0
    %268 = vmatpush1.msra.mxu0 0.0
    %269 = vmatprep.subr.mxu0 0.0
    %270 = vmatpush1.msra.mxu0 0.0
    %271 = vmatprep.subr.mxu0 0.0
    %272 = vmatpush1.msra.mxu0 0.0
    %273 = vmatprep.subr.mxu0 0.0
    %274 = vmatpush1.msra.mxu0 0.0
    %275 = vmatprep.subr.mxu0 0.0
    %276 = vmatpush1.msra.mxu0 0.0
    %277 = vmatprep.subr.mxu0 0.0
    %278 = vmatpush1.msra.mxu0 0.0
    %279 = vmatprep.subr.mxu0 0.0
    %280 = vmatpush1.msra.mxu0 0.0
    %281 = vmatprep.subr.mxu0 0.0
    %282 = vmatpush1.msra.mxu0 0.0
    %283 = vmatprep.subr.mxu0 0.0
    %284 = vmatpush1.msra.mxu0 0.0
    %285 = vmatprep.subr.mxu0 0.0
    %286 = vmatpush1.msra.mxu0 0.0
    %287 = vmatprep.subr.mxu0 0.0
    %288 = vmatpush1.msra.mxu0 0.0
    %289 = vmatprep.subr.mxu0 0.0
    %290 = vmatpush1.msra.mxu0 0.0
    %291 = vmatprep.subr.mxu0 0.0
    %292 = vmatpush1.msra.mxu0 0.0
    %293 = vmatprep.subr.mxu0 0.0
    %294 = vmatpush1.msra.mxu0 0.0
    %295 = vmatprep.subr.mxu0 0.0
    %296 = vmatpush1.msra.mxu0 0.0
    %297 = vmatprep.subr.mxu0 0.0
    %298 = vmatpush1.msra.mxu0 0.0
    %299 = vmatprep.mubr.f32.mxu0 0.0
    %300 = vmatmul.mubr.f32.gmra.mrb[0].mxu0 %v211
    %v301 = vpop.f32.mrb[0].mxu0
    %v302 = vadd.f32 %v233, %v301
    %v303 = vpop.f32.mrb[0].mxu0
    %304 = vdwg.mxu0
    %v305 = vmax.f32 %v302, 0.0
    %v306 = vld [vmem:[%s7] sm:$0xff]
    %v307 = vld [vmem:[%s7 + $0x8] sm:$0xff]
    %v308 = vld [vmem:[%s7 + $0x10] sm:$0xff]
    %v309 = vld [vmem:[%s7 + $0x18] sm:$0xff]
    %v310 = vld [vmem:[%s7 + $0x20] sm:$0xff]
    %v311 = vld [vmem:[%s7 + $0x28] sm:$0xff]
    %v312 = vld [vmem:[%s7 + $0x30] sm:$0xff]
    %v313 = vld [vmem:[%s7 + $0x38] sm:$0xff]
    %v314 = vld [vmem:[%s7 + $0x40] sm:$0xff]
    %v315 = vld [vmem:[%s7 + $0x48] sm:$0xff]
    %v316 = vld [vmem:[%s7 + $0x50] sm:$0xff]
    %v317 = vld [vmem:[%s7 + $0x58] sm:$0xff]
    %v318 = vld [vmem:[%s7 + $0x60] sm:$0xff]
    %v319 = vld [vmem:[%s7 + $0x68] sm:$0xff]
    %v320 = vld [vmem:[%s7 + $0x70] sm:$0xff]
    %v321 = vld [vmem:[%s7 + $0x78] sm:$0xff]
    %v322 = vld [vmem:[%s8] sm:$0x1]
    %v324 = vlaneseq
    %v325 = vshrl.u32 %v324, 7
    %v326 = vsub.s32 0, %v325
    %v327 = vrot.slane %v322, %v326
    %329 = vmatprep.subr.mxu0 0.0
    %330 = vmatpush1.msra.mxu0 %v306
    %331 = vmatprep.subr.mxu0 0.0
    %332 = vmatpush1.msra.mxu0 %v307
    %333 = vmatprep.subr.mxu0 0.0
    %334 = vmatpush1.msra.mxu0 %v308
    %335 = vmatprep.subr.mxu0 0.0
    %336 = vmatpush1.msra.mxu0 %v309
    %337 = vmatprep.subr.mxu0 0.0
    %338 = vmatpush1.msra.mxu0 %v310
    %339 = vmatprep.subr.mxu0 0.0
    %340 = vmatpush1.msra.mxu0 %v311
    %341 = vmatprep.subr.mxu0 0.0
    %342 = vmatpush1.msra.mxu0 %v312
    %343 = vmatprep.subr.mxu0 0.0
    %344 = vmatpush1.msra.mxu0 %v313
    %345 = vmatprep.subr.mxu0 0.0
    %346 = vmatpush1.msra.mxu0 %v314
    %347 = vmatprep.subr.mxu0 0.0
    %348 = vmatpush1.msra.mxu0 %v315
    %349 = vmatprep.subr.mxu0 0.0
    %350 = vmatpush1.msra.mxu0 %v316
    %351 = vmatprep.subr.mxu0 0.0
    %352 = vmatpush1.msra.mxu0 %v317
    %353 = vmatprep.subr.mxu0 0.0
    %354 = vmatpush1.msra.mxu0 %v318
    %355 = vmatprep.subr.mxu0 0.0
    %356 = vmatpush1.msra.mxu0 %v319
    %357 = vmatprep.subr.mxu0 0.0
    %358 = vmatpush1.msra.mxu0 %v320
    %359 = vmatprep.subr.mxu0 0.0
    %360 = vmatpush1.msra.mxu0 %v321
    %361 = vmatprep.subr.mxu0 0.0
    %362 = vmatpush1.msra.mxu0 0.0
    %363 = vmatprep.subr.mxu0 0.0
    %364 = vmatpush1.msra.mxu0 0.0
    %365 = vmatprep.subr.mxu0 0.0
    %366 = vmatpush1.msra.mxu0 0.0
    %367 = vmatprep.subr.mxu0 0.0
    %368 = vmatpush1.msra.mxu0 0.0
    %369 = vmatprep.subr.mxu0 0.0
    %370 = vmatpush1.msra.mxu0 0.0
    %371 = vmatprep.subr.mxu0 0.0
    %372 = vmatpush1.msra.mxu0 0.0
    %373 = vmatprep.subr.mxu0 0.0
    %374 = vmatpush1.msra.mxu0 0.0
    %375 = vmatprep.subr.mxu0 0.0
    %376 = vmatpush1.msra.mxu0 0.0
    %377 = vmatprep.subr.mxu0 0.0
    %378 = vmatpush1.msra.mxu0 0.0
    %379 = vmatprep.subr.mxu0 0.0
    %380 = vmatpush1.msra.mxu0 0.0
    %381 = vmatprep.subr.mxu0 0.0
    %382 = vmatpush1.msra.mxu0 0.0
    %383 = vmatprep.subr.mxu0 0.0
    %384 = vmatpush1.msra.mxu0 0.0
    %385 = vmatprep.subr.mxu0 0.0
    %386 = vmatpush1.msra.mxu0 0.0
    %387 = vmatprep.subr.mxu0 0.0
    %388 = vmatpush1.msra.mxu0 0.0
    %389 = vmatprep.subr.mxu0 0.0
    %390 = vmatpush1.msra.mxu0 0.0
    %391 = vmatprep.subr.mxu0 0.0
    %392 = vmatpush1.msra.mxu0 0.0
    %393 = vmatprep.mubr.f32.mxu0 0.0
    %394 = vmatmul.mubr.f32.gmra.mrb[0].mxu0 %v305
    %v395 = vpop.f32.mrb[0].mxu0
    %v396 = vadd.f32 %v327, %v395
    %v397 = vpop.f32.mrb[0].mxu0
    %398 = vdwg.mxu0
    %399 = vst [vmem:[#allocation2] sm:$0xff] %v396
    // Predicated region
    $region38: #{dqn_forward.1} parent=1 // pred_check
      _
    $region39: #{dqn_forward.1} parent=1 // pred_check_branch
      %401 = sbr.rel (0) target = $region41
    $region40: #{dqn_forward.1} parent=1 // pred_region
      %s403 = ssub.s32 128, 128
      %404 = vsyncadd [#allocation3], %s403
      %s406 = sshll.u32 [#allocation2], 4
      %s407 = int_to_ptr.vmem [resolvable:$true] %s406
      %409 = dma.vmem_to_hbm [thread:$0]  %s407, 128, %s9, [#allocation3]
    $region41: #{dqn_forward.1} parent=1 // pred_fallthru
      _
    // Predicated region
    $region42: #{dqn_forward.1} parent=1 // pred_check
      _
    $region43: #{dqn_forward.1} parent=1 // pred_check_branch
      %411 = sbr.rel (0) target = $region45
    $region44: #{dqn_forward.1} parent=1 // pred_region
      %412 = dma.done [#allocation3], 128
    $region45: #{dqn_forward.1} parent=1 // pred_fallthru
      _
    %413 = vsyncpa [#allocation3], 1

</llo_original>
